<compile_context>
chip_gen: v7x
topology: tpu7x:2x2x1
jax: 0.10.0
libtpu: 0.0.40
codegen_flags: <defaults>
</compile_context>

<pallas_src>
import functools

import jax
import jax.numpy as jnp
from jax.experimental import pallas as pl
from jax.experimental.pallas import tpu as pltpu


def _mlp_kernel(x_ref, *refs, num_hidden, compute_dtype):
    """Fused MLP forward for one batch tile (batch on the lane axis).

    x_ref : [d_in, batch_tile]
    refs  : (w0, b0, w1, b1, ..., w_last, b_last, out_ref)
            w_i : [fan_out, fan_in] (PyTorch nn.Linear layout, compute_dtype)
            b_i : [fan_out, 1]      (f32)
    Hidden layers use tanh (EUP); final layer is linear; accumulation in f32.
    """
    out_ref = refs[-1]
    param_refs = refs[:-1]
    needs_cast = compute_dtype != jnp.float32

    h = x_ref[...].astype(jnp.float32)          # [d_in, batch_tile]
    for layer in range(num_hidden + 1):
        w = param_refs[2 * layer][...]          # [fan_out, fan_in]
        b = param_refs[2 * layer + 1][...]      # [fan_out, 1]
        lhs = w
        rhs = h.astype(compute_dtype) if needs_cast else h
        h = jnp.dot(lhs, rhs, preferred_element_type=jnp.float32) + b
        if layer < num_hidden:
            h = jnp.tanh(h)
    out_ref[...] = h.astype(out_ref.dtype)      # [d_out, batch_tile] lane-dense


def pinn_forward(x, weights, biases, *, batch_tile=1024,
                 compute_dtype=jnp.float32):
    """Evaluate the PINN's MLP on x: [N, input_dim] -> [N, output_dim].

    weights[i] has shape [fan_out, fan_in] (same as torch nn.Linear.weight),
    biases[i] has shape [fan_out].
    """
    n, d_in = x.shape
    d_out = weights[-1].shape[0]
    num_hidden = len(weights) - 1

    # Pad N up to a multiple of batch_tile; transpose so batch is on lanes.
    n_tiles = pl.cdiv(n, batch_tile)
    n_pad = n_tiles * batch_tile
    xt = x.T                                    # [d_in, N]
    if n_pad != n:
        xt = jnp.pad(xt, ((0, 0), (0, n_pad - n)))

    grid = (n_tiles,)

    in_specs = [pl.BlockSpec((d_in, batch_tile), lambda i: (0, i))]
    args = [xt]
    flops = 0
    for w, b in zip(weights, biases):
        fo, fi = w.shape
        # Full-array blocks for the (replicated) parameters; same block index
        # every grid step -> stays resident in VMEM, no re-DMA.
        in_specs.append(pl.BlockSpec((fo, fi), lambda i: (0, 0)))
        in_specs.append(pl.BlockSpec((fo, 1), lambda i: (0, 0)))
        args.append(w.astype(compute_dtype))
        args.append(b.reshape(fo, 1).astype(jnp.float32))
        flops += 2 * fo * fi * n_pad

    out_spec = pl.BlockSpec((d_out, batch_tile), lambda i: (0, i))

    kernel = functools.partial(_mlp_kernel, num_hidden=num_hidden,
                               compute_dtype=compute_dtype)

    bytes_accessed = (xt.size * xt.dtype.itemsize
                      + sum(a.size * a.dtype.itemsize for a in args[1:])
                      + d_out * n_pad * x.dtype.itemsize)

    out_t = pl.pallas_call(
        kernel,
        out_shape=jax.ShapeDtypeStruct((d_out, n_pad), x.dtype),
        grid_spec=pl.GridSpec(
            grid=grid,
            in_specs=in_specs,
            out_specs=out_spec,
        ),
        compiler_params=pltpu.CompilerParams(
            dimension_semantics=("parallel",)),
        cost_estimate=pl.CostEstimate(
            flops=flops,
            transcendentals=sum(w.shape[0] for w in weights[:-1]) * n_pad,
            bytes_accessed=bytes_accessed),
    )(*args)

    return out_t[:, :n].T                       # back to [N, d_out]


def init_mlp_params(key, input_dim, hidden_layers, output_dim):
    """Deterministic init matching nn.Linear (uniform +-1/sqrt(fan_in)).

    Weights are stored [fan_out, fan_in] exactly like torch nn.Linear.weight.
    """
    dims = [input_dim] + list(hidden_layers) + [output_dim]
    weights, biases = [], []
    for i in range(len(dims) - 1):
        fan_in, fan_out = dims[i], dims[i + 1]
        key, kw, kb = jax.random.split(key, 3)
        bound = 1.0 / jnp.sqrt(jnp.float32(fan_in))
        w = jax.random.uniform(kw, (fan_out, fan_in), jnp.float32,
                               minval=-bound, maxval=bound)
        b = jax.random.uniform(kb, (fan_out,), jnp.float32,
                               minval=-bound, maxval=bound)
        weights.append(w)
        biases.append(b)
    return weights, biases


def reference_forward(x, weights, biases):
    """Pure-JAX reference with nn.Linear semantics: y = x @ W.T + b."""
    h = x
    for i, (w, b) in enumerate(zip(weights, biases)):
        h = h @ w.T + b
        if i < len(weights) - 1:
            h = jnp.tanh(h)
    return h


if __name__ == "__main__":
    key = jax.random.PRNGKey(0)

    # Typical PINN setup: input (x, t) -> scalar solution u.
    input_dim = 2
    output_dim = 1
    hidden_layers = [32, 32, 32]
    n_points = 200          # not a tile multiple -> exercises the padding path

    key, kx = jax.random.split(key)
    x = jax.random.uniform(kx, (n_points, input_dim), jnp.float32,
                           minval=-1.0, maxval=1.0)

    weights, biases = init_mlp_params(key, input_dim, hidden_layers, output_dim)

    # Small demo uses batch_tile=128 (2 tiles after padding); real PINN batches
    # (1e4-1e6 collocation points) should use the default 1024 or larger.
    # On v6e/v7x, compute_dtype=jnp.bfloat16 is a further win (keep f32 here
    # to validate against the f32 reference at tight tolerance).
    u = pinn_forward(x, weights, biases, batch_tile=128,
                     compute_dtype=jnp.float32)
    u = jax.block_until_ready(u)

    u_ref = reference_forward(x, weights, biases)
    assert u.shape == (n_points, output_dim)
    assert jnp.allclose(u, u_ref, atol=1e-5, rtol=1e-5), (
        float(jnp.max(jnp.abs(u - u_ref))))

    print("KERNEL_OK")
</pallas_src>

<mosaic_0001>
module attributes {stable_mosaic.version = 11 : i64} {
  func.func @_mlp_kernel(%arg0: i32, %arg1: memref<2x128xf32, #tpu.memory_space<vmem>>, %arg2: memref<32x2xf32, #tpu.memory_space<vmem>>, %arg3: memref<32x1xf32, #tpu.memory_space<vmem>>, %arg4: memref<32x32xf32, #tpu.memory_space<vmem>>, %arg5: memref<32x1xf32, #tpu.memory_space<vmem>>, %arg6: memref<32x32xf32, #tpu.memory_space<vmem>>, %arg7: memref<32x1xf32, #tpu.memory_space<vmem>>, %arg8: memref<1x32xf32, #tpu.memory_space<vmem>>, %arg9: memref<1x1xf32, #tpu.memory_space<vmem>>, %arg10: memref<1x128xf32, #tpu.memory_space<vmem>>) attributes {dimension_semantics = [#tpu.dimension_semantics<parallel>], iteration_bounds = array<i64: 2>, scalar_prefetch = 0 : i64, scratch_operands = 0 : i64, tpu.core_type = #tpu.core_type<tc>, window_params = [{transform_indices = @transform_0, window_bounds = array<i64: 2, 128>}, {pipeline_mode = #tpu.pipeline_mode<synchronous>, transform_indices = @transform_1, window_bounds = array<i64: 32, 2>}, {pipeline_mode = #tpu.pipeline_mode<synchronous>, transform_indices = @transform_2, window_bounds = array<i64: 32, 1>}, {pipeline_mode = #tpu.pipeline_mode<synchronous>, transform_indices = @transform_3, window_bounds = array<i64: 32, 32>}, {pipeline_mode = #tpu.pipeline_mode<synchronous>, transform_indices = @transform_4, window_bounds = array<i64: 32, 1>}, {pipeline_mode = #tpu.pipeline_mode<synchronous>, transform_indices = @transform_5, window_bounds = array<i64: 32, 32>}, {pipeline_mode = #tpu.pipeline_mode<synchronous>, transform_indices = @transform_6, window_bounds = array<i64: 32, 1>}, {pipeline_mode = #tpu.pipeline_mode<synchronous>, transform_indices = @transform_7, window_bounds = array<i64: 1, 32>}, {pipeline_mode = #tpu.pipeline_mode<synchronous>, transform_indices = @transform_8, window_bounds = array<i64: 1, 1>}, {transform_indices = @transform_9, window_bounds = array<i64: 1, 128>}]} {
    %c0 = arith.constant 0 : index
    %c0_0 = arith.constant 0 : index
    %0 = vector.load %arg1[%c0, %c0_0] : memref<2x128xf32, #tpu.memory_space<vmem>>, vector<2x128xf32>
    %c0_1 = arith.constant 0 : index
    %c0_2 = arith.constant 0 : index
    %1 = vector.load %arg2[%c0_1, %c0_2] : memref<32x2xf32, #tpu.memory_space<vmem>>, vector<32x2xf32>
    %c0_3 = arith.constant 0 : index
    %c0_4 = arith.constant 0 : index
    %2 = vector.load %arg3[%c0_3, %c0_4] : memref<32x1xf32, #tpu.memory_space<vmem>>, vector<32x1xf32>
    %cst = arith.constant dense<0.000000e+00> : vector<32x128xf32>
    %3 = tpu.matmul %1, %0, %cst {dimension_numbers = #tpu.dot_dimension_numbers<[1], [0], [0], [1], [0, 0, 1, 1], [], []>} : vector<32x2xf32>, vector<2x128xf32>, vector<32x128xf32> -> vector<32x128xf32>
    %4 = vector.broadcast %2 : vector<32x1xf32> to vector<32x128xf32>
    %5 = arith.addf %3, %4 : vector<32x128xf32>
    %6 = math.tanh %5 : vector<32x128xf32>
    %c0_5 = arith.constant 0 : index
    %c0_6 = arith.constant 0 : index
    %7 = vector.load %arg4[%c0_5, %c0_6] : memref<32x32xf32, #tpu.memory_space<vmem>>, vector<32x32xf32>
    %c0_7 = arith.constant 0 : index
    %c0_8 = arith.constant 0 : index
    %8 = vector.load %arg5[%c0_7, %c0_8] : memref<32x1xf32, #tpu.memory_space<vmem>>, vector<32x1xf32>
    %cst_9 = arith.constant dense<0.000000e+00> : vector<32x128xf32>
    %9 = tpu.matmul %7, %6, %cst_9 {dimension_numbers = #tpu.dot_dimension_numbers<[1], [0], [0], [1], [0, 0, 1, 1], [], []>} : vector<32x32xf32>, vector<32x128xf32>, vector<32x128xf32> -> vector<32x128xf32>
    %10 = vector.broadcast %8 : vector<32x1xf32> to vector<32x128xf32>
    %11 = arith.addf %9, %10 : vector<32x128xf32>
    %12 = math.tanh %11 : vector<32x128xf32>
    %c0_10 = arith.constant 0 : index
    %c0_11 = arith.constant 0 : index
    %13 = vector.load %arg6[%c0_10, %c0_11] : memref<32x32xf32, #tpu.memory_space<vmem>>, vector<32x32xf32>
    %c0_12 = arith.constant 0 : index
    %c0_13 = arith.constant 0 : index
    %14 = vector.load %arg7[%c0_12, %c0_13] : memref<32x1xf32, #tpu.memory_space<vmem>>, vector<32x1xf32>
    %cst_14 = arith.constant dense<0.000000e+00> : vector<32x128xf32>
    %15 = tpu.matmul %13, %12, %cst_14 {dimension_numbers = #tpu.dot_dimension_numbers<[1], [0], [0], [1], [0, 0, 1, 1], [], []>} : vector<32x32xf32>, vector<32x128xf32>, vector<32x128xf32> -> vector<32x128xf32>
    %16 = vector.broadcast %14 : vector<32x1xf32> to vector<32x128xf32>
    %17 = arith.addf %15, %16 : vector<32x128xf32>
    %18 = math.tanh %17 : vector<32x128xf32>
    %c0_15 = arith.constant 0 : index
    %c0_16 = arith.constant 0 : index
    %19 = vector.load %arg8[%c0_15, %c0_16] : memref<1x32xf32, #tpu.memory_space<vmem>>, vector<1x32xf32>
    %c0_17 = arith.constant 0 : index
    %c0_18 = arith.constant 0 : index
    %20 = vector.load %arg9[%c0_17, %c0_18] : memref<1x1xf32, #tpu.memory_space<vmem>>, vector<1x1xf32>
    %cst_19 = arith.constant dense<0.000000e+00> : vector<1x128xf32>
    %21 = tpu.matmul %19, %18, %cst_19 {dimension_numbers = #tpu.dot_dimension_numbers<[1], [0], [0], [1], [0, 0, 1, 1], [], []>} : vector<1x32xf32>, vector<32x128xf32>, vector<1x128xf32> -> vector<1x128xf32>
    %22 = vector.broadcast %20 : vector<1x1xf32> to vector<1x128xf32>
    %23 = arith.addf %21, %22 : vector<1x128xf32>
    %c0_20 = arith.constant 0 : index
    %c0_21 = arith.constant 0 : index
    %24 = vector.load %arg10[%c0_20, %c0_21] : memref<1x128xf32, #tpu.memory_space<vmem>>, vector<1x128xf32>
    tpu.vector_store %arg10[%c0_20, %c0_21], %23 {strides = array<i32>} : memref<1x128xf32, #tpu.memory_space<vmem>>, vector<1x128xf32>,
    return
  }
  func.func @transform_0(%arg0: i32) -> (i32, i32) {
    %c0_i32 = arith.constant 0 : i32
    %c0_i32_0 = arith.constant 0 : i32
    return %c0_i32, %arg0 : i32, i32
  }
  func.func @transform_1(%arg0: i32) -> (i32, i32) {
    %c0_i32 = arith.constant 0 : i32
    %c0_i32_0 = arith.constant 0 : i32
    %c0_i32_1 = arith.constant 0 : i32
    return %c0_i32, %c0_i32_0 : i32, i32
  }
  func.func @transform_2(%arg0: i32) -> (i32, i32) {
    %c0_i32 = arith.constant 0 : i32
    %c0_i32_0 = arith.constant 0 : i32
    %c0_i32_1 = arith.constant 0 : i32
    return %c0_i32, %c0_i32_0 : i32, i32
  }
  func.func @transform_3(%arg0: i32) -> (i32, i32) {
    %c0_i32 = arith.constant 0 : i32
    %c0_i32_0 = arith.constant 0 : i32
    %c0_i32_1 = arith.constant 0 : i32
    return %c0_i32, %c0_i32_0 : i32, i32
  }
  func.func @transform_4(%arg0: i32) -> (i32, i32) {
    %c0_i32 = arith.constant 0 : i32
    %c0_i32_0 = arith.constant 0 : i32
    %c0_i32_1 = arith.constant 0 : i32
    return %c0_i32, %c0_i32_0 : i32, i32
  }
  func.func @transform_5(%arg0: i32) -> (i32, i32) {
    %c0_i32 = arith.constant 0 : i32
    %c0_i32_0 = arith.constant 0 : i32
    %c0_i32_1 = arith.constant 0 : i32
    return %c0_i32, %c0_i32_0 : i32, i32
  }
  func.func @transform_6(%arg0: i32) -> (i32, i32) {
    %c0_i32 = arith.constant 0 : i32
    %c0_i32_0 = arith.constant 0 : i32
    %c0_i32_1 = arith.constant 0 : i32
    return %c0_i32, %c0_i32_0 : i32, i32
  }
  func.func @transform_7(%arg0: i32) -> (i32, i32) {
    %c0_i32 = arith.constant 0 : i32
    %c0_i32_0 = arith.constant 0 : i32
    %c0_i32_1 = arith.constant 0 : i32
    return %c0_i32, %c0_i32_0 : i32, i32
  }
  func.func @transform_8(%arg0: i32) -> (i32, i32) {
    %c0_i32 = arith.constant 0 : i32
    %c0_i32_0 = arith.constant 0 : i32
    %c0_i32_1 = arith.constant 0 : i32
    return %c0_i32, %c0_i32_0 : i32, i32
  }
  func.func @transform_9(%arg0: i32) -> (i32, i32) {
    %c0_i32 = arith.constant 0 : i32
    %c0_i32_0 = arith.constant 0 : i32
    return %c0_i32, %arg0 : i32, i32
  }
}

</mosaic_0001>

<llo_original>
// kernel: tpu_custom_call.1
$region0: #{tpu_custom_call.1}
  #allocation0 [shape = 'u32[]', space=smem, size = 0x4, offset = 0x4, fixed_abs, tag = 'smem constant byte address 0x4 - core index']
  #allocation1 [shape = 'u32[144,128]{1,0:T(1,128)}', space=vmem, size = 0x12000, scoped, tag = 'internal scratch']
  #allocation2 [shape = 'f32[1,1]{1,0:T(1,128)S(1)}', space=vmem, size = 0x200, scoped, tag = 'scoped memory for tpu_custom_call.1']
  %s0 = inlined_call_operand.vmem [shape: f32[2,256], index: 0, kind: input, shape index: {}]
  %s1 = inlined_call_operand.vmem [shape: f32[32,2], index: 1, kind: input, shape index: {}]
  %s2 = inlined_call_operand.vmem [shape: f32[32,1], index: 2, kind: input, shape index: {}]
  %s3 = inlined_call_operand.vmem [shape: f32[32,32], index: 3, kind: input, shape index: {}]
  %s4 = inlined_call_operand.vmem [shape: f32[32,1], index: 4, kind: input, shape index: {}]
  %s5 = inlined_call_operand.vmem [shape: f32[32,32], index: 5, kind: input, shape index: {}]
  %s6 = inlined_call_operand.vmem [shape: f32[32,1], index: 6, kind: input, shape index: {}]
  %s7 = inlined_call_operand.vmem [shape: f32[1,32], index: 7, kind: input, shape index: {}]
  %s8 = inlined_call_operand.<no memory space> [shape: f32[1,1], index: 8, kind: input, shape index: {}]
  %s9 = inlined_call_operand.hbm [shape: f32[1,256], index: 9, kind: output, shape index: {}]
  %s10 = sld [smem:[#allocation0]]
  $region69: #{tpu_custom_call.1} parent=0
    _
  %s12 = ssub.s32 1, %s10
  %s13 = scalar_select 0, %s12, %s10
  %v14 = vstv %s8
  %15 = vst [vmem:[#allocation2] sm:$0x1] %v14
  $region1: #{tpu_custom_call.1} parent=0
    #allocation3 [shape = 'u8[1024]{0}', space=vmem, size = 0x400, scoped, tag = 'output window, operand 0']
    #allocation4 [shape = 's32[2]{0}', space=sflag, size = 0x8, scoped, tag = 'scoped memory for tpu_custom_call.1']
    %16 = vsyncpa [#allocation4], 0
    %s17 = scalar_lea.sflag [#allocation4], 1
    %18 = vsyncpa %s17, 0
    loop: start=0, step=1, limit=4
    $region2: #{tpu_custom_call.1} parent=1 // loop_pre_header
      _
    $region3: #{tpu_custom_call.1} parent=1 // loop_header
      %s20 = sphi 0, %s24
      %p21 = scmp.ge.s32.totalorder %s20, 4
      %s30 = sphi 0, %s32
      %s33 = sphi 0, %s30
      %s34 = sphi 0, %s33
      %s50 = sphi 0, %s34
      %s54 = sphi 0, %s54
      %s56 = sphi 0, %s54
      %s57 = sphi 0, %s56
      %s71 = sphi 0, %s57
      %s75 = sphi 0, %s75
      %s77 = sphi 0, %s75
      %s78 = sphi 0, %s77
      %s92 = sphi 0, %s78
      %s96 = sphi 0, %s96
      %s98 = sphi 0, %s96
      %s99 = sphi 0, %s98
      %s113 = sphi 0, %s99
      %s117 = sphi 0, %s117
      %s119 = sphi 0, %s117
      %s120 = sphi 0, %s119
      %s134 = sphi 0, %s120
      %s138 = sphi 0, %s138
      %s140 = sphi 0, %s138
      %s141 = sphi 0, %s140
      %s155 = sphi 0, %s141
      %s159 = sphi 0, %s159
      %s161 = sphi 0, %s159
      %s162 = sphi 0, %s161
      %s176 = sphi 0, %s162
      %s180 = sphi 0, %s180
      %s182 = sphi 0, %s180
      %s183 = sphi 0, %s182
      %s197 = sphi 0, %s183
      %s201 = sphi 0, %s201
      %s203 = sphi 0, %s201
      %s204 = sphi 0, %s203
      %s218 = sphi 0, %s204
      %s224 = sphi 0, %s226
      %s227 = sphi 0, %s224
      %s228 = sphi 0, %s227
      %s244 = sphi 0, %s228
    $region4: #{tpu_custom_call.1} parent=1 // loop_header_branch
      %23 = sbr.rel (%p21) target = $region8
    $region5: #{tpu_custom_call.1} parent=1 // loop_body
      %s25 = ssub.s32 %s20, 1
      %s26 = ssub.s32 %s20, 2
      %s27 = sadd.s32 %s20, 1
      %s28 = ssub.s32 %s20, %s27
      %p29 = scmp.eq.s32.totalorder %s28, 0
      %s31 = sadd.s32 %s30, 1
      %s32 = scalar_select %p29, %s30, %s31
      %p35 = pneg %p29
      %p36 = scmp.eq.s32.totalorder %s20, 1
      %p37 = por %p35, %p36
      %p38 = scmp.ne.s32.totalorder %s30, %s33
      %p39 = scmp.eq.s32.totalorder %s20, 0
      %p40 = por %p38, %p39
      %p41 = scmp.ne.s32.totalorder %s30, %s33
      %p42 = scmp.eq.s32.totalorder %s25, 1
      %p43 = por %p41, %p42
      %p44 = scmp.ne.s32.totalorder %s33, %s34
      %p45 = scmp.eq.s32.totalorder %s25, 0
      %p46 = por %p44, %p45
      %p47 = scmp.ne.s32.totalorder %s33, %s34
      %p48 = scmp.eq.s32.totalorder %s26, 1
      %p49 = por %p47, %p48
      %p51 = scmp.ne.s32.totalorder %s34, %s50
      %p52 = scmp.eq.s32.totalorder %s26, 0
      %p53 = por %p51, %p52
      %s55 = sadd.s32 %s54, 1
      %p58 = scmp.eq.s32.totalorder %s20, 1
      %p59 = scmp.ne.s32.totalorder %s54, %s56
      %p60 = scmp.eq.s32.totalorder %s20, 0
      %p61 = por %p59, %p60
      %p62 = scmp.ne.s32.totalorder %s54, %s56
      %p63 = scmp.eq.s32.totalorder %s25, 1
      %p64 = por %p62, %p63
      %p65 = scmp.ne.s32.totalorder %s56, %s57
      %p66 = scmp.eq.s32.totalorder %s25, 0
      %p67 = por %p65, %p66
      %p68 = scmp.ne.s32.totalorder %s56, %s57
      %p69 = scmp.eq.s32.totalorder %s26, 1
      %p70 = por %p68, %p69
      %p72 = scmp.ne.s32.totalorder %s57, %s71
      %p73 = scmp.eq.s32.totalorder %s26, 0
      %p74 = por %p72, %p73
      %s76 = sadd.s32 %s75, 1
      %p79 = scmp.eq.s32.totalorder %s20, 1
      %p80 = scmp.ne.s32.totalorder %s75, %s77
      %p81 = scmp.eq.s32.totalorder %s20, 0
      %p82 = por %p80, %p81
      %p83 = scmp.ne.s32.totalorder %s75, %s77
      %p84 = scmp.eq.s32.totalorder %s25, 1
      %p85 = por %p83, %p84
      %p86 = scmp.ne.s32.totalorder %s77, %s78
      %p87 = scmp.eq.s32.totalorder %s25, 0
      %p88 = por %p86, %p87
      %p89 = scmp.ne.s32.totalorder %s77, %s78
      %p90 = scmp.eq.s32.totalorder %s26, 1
      %p91 = por %p89, %p90
      %p93 = scmp.ne.s32.totalorder %s78, %s92
      %p94 = scmp.eq.s32.totalorder %s26, 0
      %p95 = por %p93, %p94
      %s97 = sadd.s32 %s96, 1
      %p100 = scmp.eq.s32.totalorder %s20, 1
      %p101 = scmp.ne.s32.totalorder %s96, %s98
      %p102 = scmp.eq.s32.totalorder %s20, 0
      %p103 = por %p101, %p102
      %p104 = scmp.ne.s32.totalorder %s96, %s98
      %p105 = scmp.eq.s32.totalorder %s25, 1
      %p106 = por %p104, %p105
      %p107 = scmp.ne.s32.totalorder %s98, %s99
      %p108 = scmp.eq.s32.totalorder %s25, 0
      %p109 = por %p107, %p108
      %p110 = scmp.ne.s32.totalorder %s98, %s99
      %p111 = scmp.eq.s32.totalorder %s26, 1
      %p112 = por %p110, %p111
      %p114 = scmp.ne.s32.totalorder %s99, %s113
      %p115 = scmp.eq.s32.totalorder %s26, 0
      %p116 = por %p114, %p115
      %s118 = sadd.s32 %s117, 1
      %p121 = scmp.eq.s32.totalorder %s20, 1
      %p122 = scmp.ne.s32.totalorder %s117, %s119
      %p123 = scmp.eq.s32.totalorder %s20, 0
      %p124 = por %p122, %p123
      %p125 = scmp.ne.s32.totalorder %s117, %s119
      %p126 = scmp.eq.s32.totalorder %s25, 1
      %p127 = por %p125, %p126
      %p128 = scmp.ne.s32.totalorder %s119, %s120
      %p129 = scmp.eq.s32.totalorder %s25, 0
      %p130 = por %p128, %p129
      %p131 = scmp.ne.s32.totalorder %s119, %s120
      %p132 = scmp.eq.s32.totalorder %s26, 1
      %p133 = por %p131, %p132
      %p135 = scmp.ne.s32.totalorder %s120, %s134
      %p136 = scmp.eq.s32.totalorder %s26, 0
      %p137 = por %p135, %p136
      %s139 = sadd.s32 %s138, 1
      %p142 = scmp.eq.s32.totalorder %s20, 1
      %p143 = scmp.ne.s32.totalorder %s138, %s140
      %p144 = scmp.eq.s32.totalorder %s20, 0
      %p145 = por %p143, %p144
      %p146 = scmp.ne.s32.totalorder %s138, %s140
      %p147 = scmp.eq.s32.totalorder %s25, 1
      %p148 = por %p146, %p147
      %p149 = scmp.ne.s32.totalorder %s140, %s141
      %p150 = scmp.eq.s32.totalorder %s25, 0
      %p151 = por %p149, %p150
      %p152 = scmp.ne.s32.totalorder %s140, %s141
      %p153 = scmp.eq.s32.totalorder %s26, 1
      %p154 = por %p152, %p153
      %p156 = scmp.ne.s32.totalorder %s141, %s155
      %p157 = scmp.eq.s32.totalorder %s26, 0
      %p158 = por %p156, %p157
      %s160 = sadd.s32 %s159, 1
      %p163 = scmp.eq.s32.totalorder %s20, 1
      %p164 = scmp.ne.s32.totalorder %s159, %s161
      %p165 = scmp.eq.s32.totalorder %s20, 0
      %p166 = por %p164, %p165
      %p167 = scmp.ne.s32.totalorder %s159, %s161
      %p168 = scmp.eq.s32.totalorder %s25, 1
      %p169 = por %p167, %p168
      %p170 = scmp.ne.s32.totalorder %s161, %s162
      %p171 = scmp.eq.s32.totalorder %s25, 0
      %p172 = por %p170, %p171
      %p173 = scmp.ne.s32.totalorder %s161, %s162
      %p174 = scmp.eq.s32.totalorder %s26, 1
      %p175 = por %p173, %p174
      %p177 = scmp.ne.s32.totalorder %s162, %s176
      %p178 = scmp.eq.s32.totalorder %s26, 0
      %p179 = por %p177, %p178
      %s181 = sadd.s32 %s180, 1
      %p184 = scmp.eq.s32.totalorder %s20, 1
      %p185 = scmp.ne.s32.totalorder %s180, %s182
      %p186 = scmp.eq.s32.totalorder %s20, 0
      %p187 = por %p185, %p186
      %p188 = scmp.ne.s32.totalorder %s180, %s182
      %p189 = scmp.eq.s32.totalorder %s25, 1
      %p190 = por %p188, %p189
      %p191 = scmp.ne.s32.totalorder %s182, %s183
      %p192 = scmp.eq.s32.totalorder %s25, 0
      %p193 = por %p191, %p192
      %p194 = scmp.ne.s32.totalorder %s182, %s183
      %p195 = scmp.eq.s32.totalorder %s26, 1
      %p196 = por %p194, %p195
      %p198 = scmp.ne.s32.totalorder %s183, %s197
      %p199 = scmp.eq.s32.totalorder %s26, 0
      %p200 = por %p198, %p199
      %s202 = sadd.s32 %s201, 1
      %p205 = scmp.eq.s32.totalorder %s20, 1
      %p206 = scmp.ne.s32.totalorder %s201, %s203
      %p207 = scmp.eq.s32.totalorder %s20, 0
      %p208 = por %p206, %p207
      %p209 = scmp.ne.s32.totalorder %s201, %s203
      %p210 = scmp.eq.s32.totalorder %s25, 1
      %p211 = por %p209, %p210
      %p212 = scmp.ne.s32.totalorder %s203, %s204
      %p213 = scmp.eq.s32.totalorder %s25, 0
      %p214 = por %p212, %p213
      %p215 = scmp.ne.s32.totalorder %s203, %s204
      %p216 = scmp.eq.s32.totalorder %s26, 1
      %p217 = por %p215, %p216
      %p219 = scmp.ne.s32.totalorder %s204, %s218
      %p220 = scmp.eq.s32.totalorder %s26, 0
      %p221 = por %p219, %p220
      %s222 = ssub.s32 %s20, %s27
      %p223 = scmp.eq.s32.totalorder %s222, 0
      %s225 = sadd.s32 %s224, 1
      %s226 = scalar_select %p223, %s224, %s225
      %p229 = pneg %p223
      %p230 = scmp.eq.s32.totalorder %s20, 1
      %p231 = por %p229, %p230
      %p232 = scmp.ne.s32.totalorder %s224, %s227
      %p233 = scmp.eq.s32.totalorder %s20, 0
      %p234 = por %p232, %p233
      %p235 = scmp.ne.s32.totalorder %s224, %s227
      %p236 = scmp.eq.s32.totalorder %s25, 1
      %p237 = por %p235, %p236
      %p238 = scmp.ne.s32.totalorder %s227, %s228
      %p239 = scmp.eq.s32.totalorder %s25, 0
      %p240 = por %p238, %p239
      %p241 = scmp.ne.s32.totalorder %s227, %s228
      %p242 = scmp.eq.s32.totalorder %s26, 1
      %p243 = por %p241, %p242
      %p245 = scmp.ne.s32.totalorder %s228, %s244
      %p246 = scmp.eq.s32.totalorder %s26, 0
      %p247 = por %p245, %p246
      %p248 = scmp.le.s32.totalorder 1, %s20
      %p249 = scmp.lt.s32.totalorder %s20, 3
      %p250 = pnand %p248, %p249
      %p251 = pneg %p250
      // Predicated region
      $region9: #{tpu_custom_call.1} parent=5 // pred_check
        _
      $region10: #{tpu_custom_call.1} parent=5 // pred_check_branch
        %253 = sbr.rel (%p250) target = $region12
      $region11: #{tpu_custom_call.1} parent=5 // pred_region
        %s254 = ssub.s32 %s20, 1
        // Predicated region
        $region13: #{tpu_custom_call.1} parent=11 // pred_check
          %p255 = pneg %p67
        $region14: #{tpu_custom_call.1} parent=11 // pred_check_branch
          %257 = sbr.rel (%p255) target = $region16
        $region15: #{tpu_custom_call.1} parent=11 // pred_region
          _
        $region16: #{tpu_custom_call.1} parent=11 // pred_fallthru
          _
        // Predicated region
        $region17: #{tpu_custom_call.1} parent=11 // pred_check
          %p258 = pneg %p88
        $region18: #{tpu_custom_call.1} parent=11 // pred_check_branch
          %260 = sbr.rel (%p258) target = $region20
        $region19: #{tpu_custom_call.1} parent=11 // pred_region
          _
        $region20: #{tpu_custom_call.1} parent=11 // pred_fallthru
          _
        // Predicated region
        $region21: #{tpu_custom_call.1} parent=11 // pred_check
          %p261 = pneg %p109
        $region22: #{tpu_custom_call.1} parent=11 // pred_check_branch
          %263 = sbr.rel (%p261) target = $region24
        $region23: #{tpu_custom_call.1} parent=11 // pred_region
          _
        $region24: #{tpu_custom_call.1} parent=11 // pred_fallthru
          _
        // Predicated region
        $region25: #{tpu_custom_call.1} parent=11 // pred_check
          %p264 = pneg %p130
        $region26: #{tpu_custom_call.1} parent=11 // pred_check_branch
          %266 = sbr.rel (%p264) target = $region28
        $region27: #{tpu_custom_call.1} parent=11 // pred_region
          _
        $region28: #{tpu_custom_call.1} parent=11 // pred_fallthru
          _
        // Predicated region
        $region29: #{tpu_custom_call.1} parent=11 // pred_check
          %p267 = pneg %p151
        $region30: #{tpu_custom_call.1} parent=11 // pred_check_branch
          %269 = sbr.rel (%p267) target = $region32
        $region31: #{tpu_custom_call.1} parent=11 // pred_region
          _
        $region32: #{tpu_custom_call.1} parent=11 // pred_fallthru
          _
        // Predicated region
        $region33: #{tpu_custom_call.1} parent=11 // pred_check
          %p270 = pneg %p172
        $region34: #{tpu_custom_call.1} parent=11 // pred_check_branch
          %272 = sbr.rel (%p270) target = $region36
        $region35: #{tpu_custom_call.1} parent=11 // pred_region
          _
        $region36: #{tpu_custom_call.1} parent=11 // pred_fallthru
          _
        // Predicated region
        $region37: #{tpu_custom_call.1} parent=11 // pred_check
          %p273 = pneg %p193
        $region38: #{tpu_custom_call.1} parent=11 // pred_check_branch
          %275 = sbr.rel (%p273) target = $region40
        $region39: #{tpu_custom_call.1} parent=11 // pred_region
          _
        $region40: #{tpu_custom_call.1} parent=11 // pred_fallthru
          _
        // Predicated region
        $region41: #{tpu_custom_call.1} parent=11 // pred_check
          %p276 = pneg %p214
        $region42: #{tpu_custom_call.1} parent=11 // pred_check_branch
          %278 = sbr.rel (%p276) target = $region44
        $region43: #{tpu_custom_call.1} parent=11 // pred_region
          _
        $region44: #{tpu_custom_call.1} parent=11 // pred_fallthru
          _
      $region12: #{tpu_custom_call.1} parent=5 // pred_fallthru
        _
      %p279 = scmp.lt.s32.totalorder %s20, 2
      // Predicated region
      $region45: #{tpu_custom_call.1} parent=5 // pred_check
        %p280 = pneg %p279
      $region46: #{tpu_custom_call.1} parent=5 // pred_check_branch
        %282 = sbr.rel (%p280) target = $region48
      $region47: #{tpu_custom_call.1} parent=5 // pred_region
        // Predicated region
        $region49: #{tpu_custom_call.1} parent=47 // pred_check
          %p283 = pneg %p40
        $region50: #{tpu_custom_call.1} parent=47 // pred_check_branch
          %285 = sbr.rel (%p283) target = $region52
        $region51: #{tpu_custom_call.1} parent=47 // pred_region
          %p286 = scmp.lt.s32.totalorder %s20, 1
          %s287 = scalar_select %p286, %s20, 1
          %s288 = smul.addr %s287, 2
          %s289 = scalar_lea.vmem %s0, %s288
        $region52: #{tpu_custom_call.1} parent=47 // pred_fallthru
          _
      $region48: #{tpu_custom_call.1} parent=5 // pred_fallthru
        _
      %p290 = scmp.le.s32.totalorder 1, %s20
      %p291 = scmp.lt.s32.totalorder %s20, 3
      %p292 = pnand %p290, %p291
      %p293 = pneg %p292
      // Predicated region
      $region53: #{tpu_custom_call.1} parent=5 // pred_check
        _
      $region54: #{tpu_custom_call.1} parent=5 // pred_check_branch
        %295 = sbr.rel (%p292) target = $region56
      $region55: #{tpu_custom_call.1} parent=5 // pred_region
        %s296 = ssub.s32 %s20, 1
        %p297 = scmp.lt.s32.totalorder %s25, 1
        %s298 = scalar_select %p297, %s25, 1
        %s299 = smul.addr %s298, 2
        %s300 = scalar_lea.vmem %s0, %s299
        %p301 = pneg %p46
        %p302 = pneg %p43
        %p303 = pneg %p67
        %p304 = pneg %p64
        %p305 = pneg %p88
        %p306 = pneg %p85
        %p307 = pneg %p109
        %p308 = pneg %p106
        %p309 = pneg %p130
        %p310 = pneg %p127
        %p311 = pneg %p151
        %p312 = pneg %p148
        %p313 = pneg %p172
        %p314 = pneg %p169
        %p315 = pneg %p193
        %p316 = pneg %p190
        %p317 = pneg %p214
        %p318 = pneg %p211
        %p319 = pneg %p240
        %p320 = pneg %p237
        %s321 = sand.u32 %s227, 1
        %s322 = scalar_lea.sflag [#allocation4], %s321
        %s323 = sand.u32 %s227, 1
        %s324 = scalar_lea.vmem [#allocation3], %s323
        %p325 = scmp.lt.s32.totalorder %s25, 1
        %s326 = scalar_select %p325, %s25, 1
        %s327 = smul.addr %s326, 2
        %s328 = scalar_lea.vmem %s0, %s327
        %v329 = vld [vmem:[%s328] sm:$0x3]
        %v330 = vld [vmem:[%s1] sm:$0xff]
        %v331 = vld [vmem:[%s1 + $0x8] sm:$0xff]
        %v332 = vld [vmem:[%s1 + $0x10] sm:$0xff]
        %v333 = vld [vmem:[%s1 + $0x18] sm:$0xff]
        %v334 = vld [vmem:[%s2] sm:$0xff]
        %v335 = vld [vmem:[%s2 + $0x8] sm:$0xff]
        %v336 = vld [vmem:[%s2 + $0x10] sm:$0xff]
        %v337 = vld [vmem:[%s2 + $0x18] sm:$0xff]
        %339 = vset.pattern.permute.xlu0 0
        %340 = vperm.xlu0 %339, %v334
        %v341 = vpop.permute.xlu0 %340
        %344 = vset.pattern.permute.xlu0 0
        %345 = vperm.xlu0 %344, %v335
        %v346 = vpop.permute.xlu0 %345
        %349 = vset.pattern.permute.xlu0 0
        %350 = vperm.xlu0 %349, %v336
        %v351 = vpop.permute.xlu0 %350
        %354 = vset.pattern.permute.xlu0 0
        %355 = vperm.xlu0 %354, %v337
        %v356 = vpop.permute.xlu0 %355
        %vm358 = vcmask 15360
        %v360 = vsel %vm358, %v330, 0
        %v363 = vsel %vm358, %v331, 0
        %v366 = vsel %vm358, %v332, 0
        %v369 = vsel %vm358, %v333, 0
        %vm371 = vcmask 1041408
        %v373 = vsel %vm371, %v329, 0
        %375 = vmatprep.subr.mxu0 0.0
        %376 = vmatpush1.msra.mxu0 %v373
        %377 = vmatprep.subr.mxu0 0.0
        %378 = vmatpush1.msra.mxu0 0.0
        %379 = vmatprep.subr.mxu0 0.0
        %380 = vmatpush1.msra.mxu0 0.0
        %381 = vmatprep.subr.mxu0 0.0
        %382 = vmatpush1.msra.mxu0 0.0
        %383 = vmatprep.subr.mxu0 0.0
        %384 = vmatpush1.msra.mxu0 0.0
        %385 = vmatprep.subr.mxu0 0.0
        %386 = vmatpush1.msra.mxu0 0.0
        %387 = vmatprep.subr.mxu0 0.0
        %388 = vmatpush1.msra.mxu0 0.0
        %389 = vmatprep.subr.mxu0 0.0
        %390 = vmatpush1.msra.mxu0 0.0
        %391 = vmatprep.subr.mxu0 0.0
        %392 = vmatpush1.msra.mxu0 0.0
        %393 = vmatprep.subr.mxu0 0.0
        %394 = vmatpush1.msra.mxu0 0.0
        %395 = vmatprep.subr.mxu0 0.0
        %396 = vmatpush1.msra.mxu0 0.0
        %397 = vmatprep.subr.mxu0 0.0
        %398 = vmatpush1.msra.mxu0 0.0
        %399 = vmatprep.subr.mxu0 0.0
        %400 = vmatpush1.msra.mxu0 0.0
        %401 = vmatprep.subr.mxu0 0.0
        %402 = vmatpush1.msra.mxu0 0.0
        %403 = vmatprep.subr.mxu0 0.0
        %404 = vmatpush1.msra.mxu0 0.0
        %405 = vmatprep.subr.mxu0 0.0
        %406 = vmatpush1.msra.mxu0 0.0
        %407 = vmatprep.subr.mxu0 0.0
        %408 = vmatpush1.msra.mxu0 0.0
        %409 = vmatprep.subr.mxu0 0.0
        %410 = vmatpush1.msra.mxu0 0.0
        %411 = vmatprep.subr.mxu0 0.0
        %412 = vmatpush1.msra.mxu0 0.0
        %413 = vmatprep.subr.mxu0 0.0
        %414 = vmatpush1.msra.mxu0 0.0
        %415 = vmatprep.subr.mxu0 0.0
        %416 = vmatpush1.msra.mxu0 0.0
        %417 = vmatprep.subr.mxu0 0.0
        %418 = vmatpush1.msra.mxu0 0.0
        %419 = vmatprep.subr.mxu0 0.0
        %420 = vmatpush1.msra.mxu0 0.0
        %421 = vmatprep.subr.mxu0 0.0
        %422 = vmatpush1.msra.mxu0 0.0
        %423 = vmatprep.subr.mxu0 0.0
        %424 = vmatpush1.msra.mxu0 0.0
        %425 = vmatprep.subr.mxu0 0.0
        %426 = vmatpush1.msra.mxu0 0.0
        %427 = vmatprep.subr.mxu0 0.0
        %428 = vmatpush1.msra.mxu0 0.0
        %429 = vmatprep.subr.mxu0 0.0
        %430 = vmatpush1.msra.mxu0 0.0
        %431 = vmatprep.subr.mxu0 0.0
        %432 = vmatpush1.msra.mxu0 0.0
        %433 = vmatprep.subr.mxu0 0.0
        %434 = vmatpush1.msra.mxu0 0.0
        %435 = vmatprep.subr.mxu0 0.0
        %436 = vmatpush1.msra.mxu0 0.0
        %437 = vmatprep.subr.mxu0 0.0
        %438 = vmatpush1.msra.mxu0 0.0
        %439 = vmatprep.mubr.f32.mxu0 0.0
        %440 = vmatmul.mubr.f32.gmra.mrb[0].mxu0 %v360
        %v441 = vpop.f32.mrb[0].mxu0
        %v442 = vadd.f32 %v341, %v441
        %v443 = vpop.f32.mrb[0].mxu0
        %444 = vmatprep.mubr.f32.mxu0 0.0
        %445 = vmatmul.mubr.f32.gmra.mrb[0].mxu0 %v363
        %v446 = vpop.f32.mrb[0].mxu0
        %v447 = vadd.f32 %v346, %v446
        %v448 = vpop.f32.mrb[0].mxu0
        %449 = vmatprep.mubr.f32.mxu0 0.0
        %450 = vmatmul.mubr.f32.gmra.mrb[0].mxu0 %v366
        %v451 = vpop.f32.mrb[0].mxu0
        %v452 = vadd.f32 %v351, %v451
        %v453 = vpop.f32.mrb[0].mxu0
        %454 = vmatprep.mubr.f32.mxu0 0.0
        %455 = vmatmul.mubr.f32.gmra.mrb[0].mxu0 %v369
        %v456 = vpop.f32.mrb[0].mxu0
        %v457 = vadd.f32 %v356, %v456
        %v458 = vpop.f32.mrb[0].mxu0
        %459 = vdwg.mxu0
        %v460 = vtanh.pop %v442
        %v461 = vtanh.pop %v447
        %v462 = vtanh.pop %v452
        %v463 = vtanh.pop %v457
        %v464 = vld [vmem:[%s3] sm:$0xff]
        %v465 = vld [vmem:[%s3 + $0x8] sm:$0xff]
        %v466 = vld [vmem:[%s3 + $0x10] sm:$0xff]
        %v467 = vld [vmem:[%s3 + $0x18] sm:$0xff]
        %v468 = vld [vmem:[%s4] sm:$0xff]
        %v469 = vld [vmem:[%s4 + $0x8] sm:$0xff]
        %v470 = vld [vmem:[%s4 + $0x10] sm:$0xff]
        %v471 = vld [vmem:[%s4 + $0x18] sm:$0xff]
        %473 = vset.pattern.permute.xlu0 0
        %474 = vperm.xlu0 %473, %v468
        %v475 = vpop.permute.xlu0 %474
        %478 = vset.pattern.permute.xlu0 0
        %479 = vperm.xlu0 %478, %v469
        %v480 = vpop.permute.xlu0 %479
        %483 = vset.pattern.permute.xlu0 0
        %484 = vperm.xlu0 %483, %v470
        %v485 = vpop.permute.xlu0 %484
        %488 = vset.pattern.permute.xlu0 0
        %489 = vperm.xlu0 %488, %v471
        %v490 = vpop.permute.xlu0 %489
        %vm492 = vcmask 261120
        %v494 = vsel %vm492, %v464, 0
        %v497 = vsel %vm492, %v465, 0
        %v500 = vsel %vm492, %v466, 0
        %v503 = vsel %vm492, %v467, 0
        %505 = vmatprep.subr.mxu0 0.0
        %506 = vmatpush1.msra.mxu0 %v460
        %507 = vmatprep.subr.mxu0 0.0
        %508 = vmatpush1.msra.mxu0 %v461
        %509 = vmatprep.subr.mxu0 0.0
        %510 = vmatpush1.msra.mxu0 %v462
        %511 = vmatprep.subr.mxu0 0.0
        %512 = vmatpush1.msra.mxu0 %v463
        %513 = vmatprep.subr.mxu0 0.0
        %514 = vmatpush1.msra.mxu0 0.0
        %515 = vmatprep.subr.mxu0 0.0
        %516 = vmatpush1.msra.mxu0 0.0
        %517 = vmatprep.subr.mxu0 0.0
        %518 = vmatpush1.msra.mxu0 0.0
        %519 = vmatprep.subr.mxu0 0.0
        %520 = vmatpush1.msra.mxu0 0.0
        %521 = vmatprep.subr.mxu0 0.0
        %522 = vmatpush1.msra.mxu0 0.0
        %523 = vmatprep.subr.mxu0 0.0
        %524 = vmatpush1.msra.mxu0 0.0
        %525 = vmatprep.subr.mxu0 0.0
        %526 = vmatpush1.msra.mxu0 0.0
        %527 = vmatprep.subr.mxu0 0.0
        %528 = vmatpush1.msra.mxu0 0.0
        %529 = vmatprep.subr.mxu0 0.0
        %530 = vmatpush1.msra.mxu0 0.0
        %531 = vmatprep.subr.mxu0 0.0
        %532 = vmatpush1.msra.mxu0 0.0
        %533 = vmatprep.subr.mxu0 0.0
        %534 = vmatpush1.msra.mxu0 0.0
        %535 = vmatprep.subr.mxu0 0.0
        %536 = vmatpush1.msra.mxu0 0.0
        %537 = vmatprep.subr.mxu0 0.0
        %538 = vmatpush1.msra.mxu0 0.0
        %539 = vmatprep.subr.mxu0 0.0
        %540 = vmatpush1.msra.mxu0 0.0
        %541 = vmatprep.subr.mxu0 0.0
        %542 = vmatpush1.msra.mxu0 0.0
        %543 = vmatprep.subr.mxu0 0.0
        %544 = vmatpush1.msra.mxu0 0.0
        %545 = vmatprep.subr.mxu0 0.0
        %546 = vmatpush1.msra.mxu0 0.0
        %547 = vmatprep.subr.mxu0 0.0
        %548 = vmatpush1.msra.mxu0 0.0
        %549 = vmatprep.subr.mxu0 0.0
        %550 = vmatpush1.msra.mxu0 0.0
        %551 = vmatprep.subr.mxu0 0.0
        %552 = vmatpush1.msra.mxu0 0.0
        %553 = vmatprep.subr.mxu0 0.0
        %554 = vmatpush1.msra.mxu0 0.0
        %555 = vmatprep.subr.mxu0 0.0
        %556 = vmatpush1.msra.mxu0 0.0
        %557 = vmatprep.subr.mxu0 0.0
        %558 = vmatpush1.msra.mxu0 0.0
        %559 = vmatprep.subr.mxu0 0.0
        %560 = vmatpush1.msra.mxu0 0.0
        %561 = vmatprep.subr.mxu0 0.0
        %562 = vmatpush1.msra.mxu0 0.0
        %563 = vmatprep.subr.mxu0 0.0
        %564 = vmatpush1.msra.mxu0 0.0
        %565 = vmatprep.subr.mxu0 0.0
        %566 = vmatpush1.msra.mxu0 0.0
        %567 = vmatprep.subr.mxu0 0.0
        %568 = vmatpush1.msra.mxu0 0.0
        %569 = vmatprep.mubr.f32.mxu0 0.0
        %570 = vmatmul.mubr.f32.gmra.mrb[0].mxu0 %v494
        %v571 = vpop.f32.mrb[0].mxu0
        %v572 = vadd.f32 %v475, %v571
        %v573 = vpop.f32.mrb[0].mxu0
        %574 = vmatprep.mubr.f32.mxu0 0.0
        %575 = vmatmul.mubr.f32.gmra.mrb[0].mxu0 %v497
        %v576 = vpop.f32.mrb[0].mxu0
        %v577 = vadd.f32 %v480, %v576
        %v578 = vpop.f32.mrb[0].mxu0
        %579 = vmatprep.mubr.f32.mxu0 0.0
        %580 = vmatmul.mubr.f32.gmra.mrb[0].mxu0 %v500
        %v581 = vpop.f32.mrb[0].mxu0
        %v582 = vadd.f32 %v485, %v581
        %v583 = vpop.f32.mrb[0].mxu0
        %584 = vmatprep.mubr.f32.mxu0 0.0
        %585 = vmatmul.mubr.f32.gmra.mrb[0].mxu0 %v503
        %v586 = vpop.f32.mrb[0].mxu0
        %v587 = vadd.f32 %v490, %v586
        %v588 = vpop.f32.mrb[0].mxu0
        %589 = vdwg.mxu0
        %v590 = vtanh.pop %v572
        %v591 = vtanh.pop %v577
        %v592 = vtanh.pop %v582
        %v593 = vtanh.pop %v587
        %v594 = vld [vmem:[%s5] sm:$0xff]
        %v595 = vld [vmem:[%s5 + $0x8] sm:$0xff]
        %v596 = vld [vmem:[%s5 + $0x10] sm:$0xff]
        %v597 = vld [vmem:[%s5 + $0x18] sm:$0xff]
        %v598 = vld [vmem:[%s6] sm:$0xff]
        %v599 = vld [vmem:[%s6 + $0x8] sm:$0xff]
        %v600 = vld [vmem:[%s6 + $0x10] sm:$0xff]
        %v601 = vld [vmem:[%s6 + $0x18] sm:$0xff]
        %603 = vset.pattern.permute.xlu0 0
        %604 = vperm.xlu0 %603, %v598
        %v605 = vpop.permute.xlu0 %604
        %608 = vset.pattern.permute.xlu0 0
        %609 = vperm.xlu0 %608, %v599
        %v610 = vpop.permute.xlu0 %609
        %613 = vset.pattern.permute.xlu0 0
        %614 = vperm.xlu0 %613, %v600
        %v615 = vpop.permute.xlu0 %614
        %618 = vset.pattern.permute.xlu0 0
        %619 = vperm.xlu0 %618, %v601
        %v620 = vpop.permute.xlu0 %619
        %v623 = vsel %vm492, %v594, 0
        %v626 = vsel %vm492, %v595, 0
        %v629 = vsel %vm492, %v596, 0
        %v632 = vsel %vm492, %v597, 0
        %634 = vmatprep.subr.mxu0 0.0
        %635 = vmatpush1.msra.mxu0 %v590
        %636 = vmatprep.subr.mxu0 0.0
        %637 = vmatpush1.msra.mxu0 %v591
        %638 = vmatprep.subr.mxu0 0.0
        %639 = vmatpush1.msra.mxu0 %v592
        %640 = vmatprep.subr.mxu0 0.0
        %641 = vmatpush1.msra.mxu0 %v593
        %642 = vmatprep.subr.mxu0 0.0
        %643 = vmatpush1.msra.mxu0 0.0
        %644 = vmatprep.subr.mxu0 0.0
        %645 = vmatpush1.msra.mxu0 0.0
        %646 = vmatprep.subr.mxu0 0.0
        %647 = vmatpush1.msra.mxu0 0.0
        %648 = vmatprep.subr.mxu0 0.0
        %649 = vmatpush1.msra.mxu0 0.0
        %650 = vmatprep.subr.mxu0 0.0
        %651 = vmatpush1.msra.mxu0 0.0
        %652 = vmatprep.subr.mxu0 0.0
        %653 = vmatpush1.msra.mxu0 0.0
        %654 = vmatprep.subr.mxu0 0.0
        %655 = vmatpush1.msra.mxu0 0.0
        %656 = vmatprep.subr.mxu0 0.0
        %657 = vmatpush1.msra.mxu0 0.0
        %658 = vmatprep.subr.mxu0 0.0
        %659 = vmatpush1.msra.mxu0 0.0
        %660 = vmatprep.subr.mxu0 0.0
        %661 = vmatpush1.msra.mxu0 0.0
        %662 = vmatprep.subr.mxu0 0.0
        %663 = vmatpush1.msra.mxu0 0.0
        %664 = vmatprep.subr.mxu0 0.0
        %665 = vmatpush1.msra.mxu0 0.0
        %666 = vmatprep.subr.mxu0 0.0
        %667 = vmatpush1.msra.mxu0 0.0
        %668 = vmatprep.subr.mxu0 0.0
        %669 = vmatpush1.msra.mxu0 0.0
        %670 = vmatprep.subr.mxu0 0.0
        %671 = vmatpush1.msra.mxu0 0.0
        %672 = vmatprep.subr.mxu0 0.0
        %673 = vmatpush1.msra.mxu0 0.0
        %674 = vmatprep.subr.mxu0 0.0
        %675 = vmatpush1.msra.mxu0 0.0
        %676 = vmatprep.subr.mxu0 0.0
        %677 = vmatpush1.msra.mxu0 0.0
        %678 = vmatprep.subr.mxu0 0.0
        %679 = vmatpush1.msra.mxu0 0.0
        %680 = vmatprep.subr.mxu0 0.0
        %681 = vmatpush1.msra.mxu0 0.0
        %682 = vmatprep.subr.mxu0 0.0
        %683 = vmatpush1.msra.mxu0 0.0
        %684 = vmatprep.subr.mxu0 0.0
        %685 = vmatpush1.msra.mxu0 0.0
        %686 = vmatprep.subr.mxu0 0.0
        %687 = vmatpush1.msra.mxu0 0.0
        %688 = vmatprep.subr.mxu0 0.0
        %689 = vmatpush1.msra.mxu0 0.0
        %690 = vmatprep.subr.mxu0 0.0
        %691 = vmatpush1.msra.mxu0 0.0
        %692 = vmatprep.subr.mxu0 0.0
        %693 = vmatpush1.msra.mxu0 0.0
        %694 = vmatprep.subr.mxu0 0.0
        %695 = vmatpush1.msra.mxu0 0.0
        %696 = vmatprep.subr.mxu0 0.0
        %697 = vmatpush1.msra.mxu0 0.0
        %698 = vmatprep.mubr.f32.mxu0 0.0
        %699 = vmatmul.mubr.f32.gmra.mrb[0].mxu0 %v623
        %v700 = vpop.f32.mrb[0].mxu0
        %v701 = vadd.f32 %v605, %v700
        %v702 = vpop.f32.mrb[0].mxu0
        %703 = vmatprep.mubr.f32.mxu0 0.0
        %704 = vmatmul.mubr.f32.gmra.mrb[0].mxu0 %v626
        %v705 = vpop.f32.mrb[0].mxu0
        %v706 = vadd.f32 %v610, %v705
        %v707 = vpop.f32.mrb[0].mxu0
        %708 = vmatprep.mubr.f32.mxu0 0.0
        %709 = vmatmul.mubr.f32.gmra.mrb[0].mxu0 %v629
        %v710 = vpop.f32.mrb[0].mxu0
        %v711 = vadd.f32 %v615, %v710
        %v712 = vpop.f32.mrb[0].mxu0
        %713 = vmatprep.mubr.f32.mxu0 0.0
        %714 = vmatmul.mubr.f32.gmra.mrb[0].mxu0 %v632
        %v715 = vpop.f32.mrb[0].mxu0
        %v716 = vadd.f32 %v620, %v715
        %v717 = vpop.f32.mrb[0].mxu0
        %718 = vdwg.mxu0
        %v719 = vtanh.pop %v701
        %v720 = vtanh.pop %v706
        %v721 = vtanh.pop %v711
        %v722 = vtanh.pop %v716
        %v723 = vld [vmem:[%s7] sm:$0x1]
        %v724 = vld [vmem:[#allocation2] sm:$0x1]
        %726 = vset.pattern.permute.xlu0 0
        %727 = vperm.xlu0 %726, %v724
        %v728 = vpop.permute.xlu0 %727
        %v730 = vlaneseq
        %v731 = vshrl.u32 %v730, 7
        %v732 = vsub.s32 0, %v731
        %v733 = vrot.slane %v728, %v732
        %v735 = vsel %vm492, %v723, 0
        %737 = vmatprep.subr.mxu0 0.0
        %738 = vmatpush1.msra.mxu0 %v719
        %739 = vmatprep.subr.mxu0 0.0
        %740 = vmatpush1.msra.mxu0 %v720
        %741 = vmatprep.subr.mxu0 0.0
        %742 = vmatpush1.msra.mxu0 %v721
        %743 = vmatprep.subr.mxu0 0.0
        %744 = vmatpush1.msra.mxu0 %v722
        %745 = vmatprep.subr.mxu0 0.0
        %746 = vmatpush1.msra.mxu0 0.0
        %747 = vmatprep.subr.mxu0 0.0
        %748 = vmatpush1.msra.mxu0 0.0
        %749 = vmatprep.subr.mxu0 0.0
        %750 = vmatpush1.msra.mxu0 0.0
        %751 = vmatprep.subr.mxu0 0.0
        %752 = vmatpush1.msra.mxu0 0.0
        %753 = vmatprep.subr.mxu0 0.0
        %754 = vmatpush1.msra.mxu0 0.0
        %755 = vmatprep.subr.mxu0 0.0
        %756 = vmatpush1.msra.mxu0 0.0
        %757 = vmatprep.subr.mxu0 0.0
        %758 = vmatpush1.msra.mxu0 0.0
        %759 = vmatprep.subr.mxu0 0.0
        %760 = vmatpush1.msra.mxu0 0.0
        %761 = vmatprep.subr.mxu0 0.0
        %762 = vmatpush1.msra.mxu0 0.0
        %763 = vmatprep.subr.mxu0 0.0
        %764 = vmatpush1.msra.mxu0 0.0
        %765 = vmatprep.subr.mxu0 0.0
        %766 = vmatpush1.msra.mxu0 0.0
        %767 = vmatprep.subr.mxu0 0.0
        %768 = vmatpush1.msra.mxu0 0.0
        %769 = vmatprep.subr.mxu0 0.0
        %770 = vmatpush1.msra.mxu0 0.0
        %771 = vmatprep.subr.mxu0 0.0
        %772 = vmatpush1.msra.mxu0 0.0
        %773 = vmatprep.subr.mxu0 0.0
        %774 = vmatpush1.msra.mxu0 0.0
        %775 = vmatprep.subr.mxu0 0.0
        %776 = vmatpush1.msra.mxu0 0.0
        %777 = vmatprep.subr.mxu0 0.0
        %778 = vmatpush1.msra.mxu0 0.0
        %779 = vmatprep.subr.mxu0 0.0
        %780 = vmatpush1.msra.mxu0 0.0
        %781 = vmatprep.subr.mxu0 0.0
        %782 = vmatpush1.msra.mxu0 0.0
        %783 = vmatprep.subr.mxu0 0.0
        %784 = vmatpush1.msra.mxu0 0.0
        %785 = vmatprep.subr.mxu0 0.0
        %786 = vmatpush1.msra.mxu0 0.0
        %787 = vmatprep.subr.mxu0 0.0
        %788 = vmatpush1.msra.mxu0 0.0
        %789 = vmatprep.subr.mxu0 0.0
        %790 = vmatpush1.msra.mxu0 0.0
        %791 = vmatprep.subr.mxu0 0.0
        %792 = vmatpush1.msra.mxu0 0.0
        %793 = vmatprep.subr.mxu0 0.0
        %794 = vmatpush1.msra.mxu0 0.0
        %795 = vmatprep.subr.mxu0 0.0
        %796 = vmatpush1.msra.mxu0 0.0
        %797 = vmatprep.subr.mxu0 0.0
        %798 = vmatpush1.msra.mxu0 0.0
        %799 = vmatprep.subr.mxu0 0.0
        %800 = vmatpush1.msra.mxu0 0.0
        %801 = vmatprep.mubr.f32.mxu0 0.0
        %802 = vmatmul.mubr.f32.gmra.mrb[0].mxu0 %v735
        %v803 = vpop.f32.mrb[0].mxu0
        %v804 = vadd.f32 %v733, %v803
        %v805 = vpop.f32.mrb[0].mxu0
        %806 = vdwg.mxu0
        %807 = vst [vmem:[%s324] sm:$0x1] %v804
        %s808 = sand.u32 %s227, 1
        %s809 = scalar_lea.sflag [#allocation4], %s808
        %s810 = sand.u32 %s227, 1
        %s811 = scalar_lea.vmem [#allocation3], %s810
        // Predicated region
        $region57: #{tpu_custom_call.1} parent=55 // pred_check
          %p812 = pneg %p237
        $region58: #{tpu_custom_call.1} parent=55 // pred_check_branch
          %814 = sbr.rel (%p812) target = $region60
        $region59: #{tpu_custom_call.1} parent=55 // pred_region
          %s816 = ssub.s32 16, 16
          %817 = vsyncadd %s809, %s816
          %s818 = smul.addr %s25, 16
          %s819 = scalar_lea.hbm %s9, %s818
          %s821 = sshll.u32 %s811, 4
          %s822 = int_to_ptr.vmem [resolvable:$true] %s821
          %824 = dma.vmem_to_hbm [thread:$0]  %s822, 16, %s819, %s809
        $region60: #{tpu_custom_call.1} parent=55 // pred_fallthru
          _
      $region56: #{tpu_custom_call.1} parent=5 // pred_fallthru
        _
      %p825 = scmp.le.s32.totalorder 2, %s20
      // Predicated region
      $region61: #{tpu_custom_call.1} parent=5 // pred_check
        %p826 = pneg %p825
      $region62: #{tpu_custom_call.1} parent=5 // pred_check_branch
        %828 = sbr.rel (%p826) target = $region64
      $region63: #{tpu_custom_call.1} parent=5 // pred_region
        %s829 = ssub.s32 %s20, 2
        // Predicated region
        $region65: #{tpu_custom_call.1} parent=63 // pred_check
          %p830 = pneg %p243
        $region66: #{tpu_custom_call.1} parent=63 // pred_check_branch
          %832 = sbr.rel (%p830) target = $region68
        $region67: #{tpu_custom_call.1} parent=63 // pred_region
          %s833 = sand.u32 %s228, 1
          %s834 = scalar_lea.sflag [#allocation4], %s833
          %s835 = sand.u32 %s228, 1
          %s836 = scalar_lea.vmem [#allocation3], %s835
          %837 = dma.done %s834, 16
        $region68: #{tpu_custom_call.1} parent=63 // pred_fallthru
          _
      $region64: #{tpu_custom_call.1} parent=5 // pred_fallthru
        _
    $region6: #{tpu_custom_call.1} parent=1 // loop_footer
      %s24 = sadd.s32 1, %s20
    $region7: #{tpu_custom_call.1} parent=1 // loop_footer_branch
      %19 = sbr.rel target = $region3
    $region8: #{tpu_custom_call.1} parent=1 // loop_exit
      _
    %838 = vsyncpa [#allocation4], 1
    %s839 = scalar_lea.sflag [#allocation4], 1
    %840 = vsyncpa %s839, 1

</llo_original>
